<compile_context>
chip_gen: v5e
topology: v5e:2x2
jax: 0.10.0
libtpu: 0.0.40
codegen_flags: <defaults>
</compile_context>

<pallas_src>
import jax
import jax.numpy as jnp
from jax.experimental import pallas as pl
from jax.experimental.pallas import tpu as pltpu


HIDDEN = 128      # backbone width fixed by the PyTorch module
LANE = 128        # TPU lane width
SUBLANE = 8       # f32 sublane granule


def _cdiv(a, b):
    return -(-a // b)


def _round_up(n, m):
    return ((n + m - 1) // m) * m


def actor_critic_kernel(xT_ref, w1T_ref, b1_ref, w2T_ref, b2_ref,
                        whT_ref, bh_ref, out_ref):
    """Fused feature-major forward: Linear->ReLU->Linear->ReLU->fused heads.

    Activations carry features on the sublane axis and batch on the lane axis,
    so the output is a compact (OUT_ROWS, TB) f32 tile: rows [0, n_actions) are
    actor logits, row n_actions is the critic value, remaining rows are padding.
    """
    xT = xT_ref[...].astype(jnp.bfloat16)                               # (n_obs_pad, TB)

    h1 = jnp.dot(w1T_ref[...], xT,
                 preferred_element_type=jnp.float32) + b1_ref[...]      # (HIDDEN, TB)
    h1 = jnp.maximum(h1, 0.0)

    h2 = jnp.dot(w2T_ref[...], h1.astype(jnp.bfloat16),
                 preferred_element_type=jnp.float32) + b2_ref[...]      # (HIDDEN, TB)
    h2 = jnp.maximum(h2, 0.0)

    head = jnp.dot(whT_ref[...], h2.astype(jnp.bfloat16),
                   preferred_element_type=jnp.float32) + bh_ref[...]    # (OUT_ROWS, TB)

    out_ref[...] = head.astype(out_ref.dtype)


def prepare_params(params):
    """One-time weight preparation (hoisted out of the per-call forward path)."""
    w1, b1, w2, b2, wa, ba, wc, bc = params
    n_obs, hidden = w1.shape
    assert hidden == HIDDEN
    n_actions = wa.shape[1]

    n_obs_pad = _round_up(max(n_obs, SUBLANE), SUBLANE)
    out_rows = _round_up(n_actions + 1, SUBLANE)

    # Transposed / padded / bf16-cast weights; biases as f32 columns.
    w1T = jnp.pad(w1.T, ((0, 0), (0, n_obs_pad - n_obs))).astype(jnp.bfloat16)
    b1c = b1.reshape(hidden, 1).astype(jnp.float32)
    w2T = w2.T.astype(jnp.bfloat16)
    b2c = b2.reshape(hidden, 1).astype(jnp.float32)

    # Fused heads: rows [0, n_actions) = actor, row n_actions = critic, rest pad.
    whT = jnp.pad(jnp.concatenate([wa.T, wc.T], axis=0),
                  ((0, out_rows - (n_actions + 1)), (0, 0))).astype(jnp.bfloat16)
    bhc = jnp.pad(jnp.concatenate([ba, bc], axis=1).reshape(-1, 1),
                  ((0, out_rows - (n_actions + 1)), (0, 0))).astype(jnp.float32)

    return dict(w1T=w1T, b1=b1c, w2T=w2T, b2=b2c, whT=whT, bh=bhc,
                n_obs=n_obs, n_obs_pad=n_obs_pad,
                n_actions=n_actions, out_rows=out_rows, hidden=hidden)


def _choose_batch_tiling(batch, tb_max):
    """Balanced lane tiles (multiple of 128), >=2 grid steps when possible (v7x)."""
    n_tiles = max(1, _cdiv(batch, tb_max))
    if batch >= 2 * LANE:
        n_tiles = max(n_tiles, 2)
    tb = _round_up(_cdiv(batch, n_tiles), LANE)
    return tb, n_tiles * tb


def actor_critic_forward(x, prep, *, tb_max=2048):
    """x: (B, n_obs) f32; prep: output of prepare_params. Returns (probs, value)."""
    B, n_obs = x.shape
    assert n_obs == prep["n_obs"]
    n_actions = prep["n_actions"]
    n_obs_pad = prep["n_obs_pad"]
    out_rows = prep["out_rows"]
    hidden = prep["hidden"]

    tb, b_pad = _choose_batch_tiling(B, tb_max)

    # Feature-major activations: batch on the lane axis (tiny transpose/pad).
    xT = jnp.pad(x.T, ((0, n_obs_pad - n_obs), (0, b_pad - B)))

    grid = (b_pad // tb,)
    out = pl.pallas_call(
        actor_critic_kernel,
        out_shape=jax.ShapeDtypeStruct((out_rows, b_pad), jnp.float32),
        grid=grid,
        in_specs=[
            pl.BlockSpec((n_obs_pad, tb), lambda i: (0, i)),      # x^T tile
            pl.BlockSpec((hidden, n_obs_pad), lambda i: (0, 0)),  # w1^T (resident)
            pl.BlockSpec((hidden, 1), lambda i: (0, 0)),          # b1 column
            pl.BlockSpec((hidden, hidden), lambda i: (0, 0)),     # w2^T (resident)
            pl.BlockSpec((hidden, 1), lambda i: (0, 0)),          # b2 column
            pl.BlockSpec((out_rows, hidden), lambda i: (0, 0)),   # fused head W^T
            pl.BlockSpec((out_rows, 1), lambda i: (0, 0)),        # fused head bias
        ],
        out_specs=pl.BlockSpec((out_rows, tb), lambda i: (0, i)),
        compiler_params=pltpu.CompilerParams(
            dimension_semantics=("parallel",)),
    )(xT, prep["w1T"], prep["b1"], prep["w2T"], prep["b2"],
      prep["whT"], prep["bh"])

    logits = out[:n_actions, :B].T                       # (B, n_actions)
    critic = out[n_actions:n_actions + 1, :B].T          # (B, 1), f32
    # Softmax on the tiny sliced logits (exact normalization; per perf review the
    # kernel stays a pure matmul pipeline in the compact feature-major layout).
    actor = jax.nn.softmax(logits, axis=-1)
    return actor, critic


def init_params(key, n_observations, n_actions, hidden=HIDDEN):
    # Deterministic init mirroring nn.Linear's U(-1/sqrt(fan_in), +1/sqrt(fan_in)).
    def linear(key, fan_in, fan_out):
        kw, kb = jax.random.split(key)
        bound = 1.0 / jnp.sqrt(jnp.float32(fan_in))
        w = jax.random.uniform(kw, (fan_in, fan_out), jnp.float32, -bound, bound)
        b = jax.random.uniform(kb, (1, fan_out), jnp.float32, -bound, bound)
        return w, b

    k1, k2, k3, k4 = jax.random.split(key, 4)
    w1, b1 = linear(k1, n_observations, hidden)
    w2, b2 = linear(k2, hidden, hidden)
    wa, ba = linear(k3, hidden, n_actions)
    wc, bc = linear(k4, hidden, 1)
    return (w1, b1, w2, b2, wa, ba, wc, bc)


if __name__ == "__main__":
    n_observations = 4   # CartPole-style observation dim
    n_actions = 2
    batch = 8

    key = jax.random.PRNGKey(0)
    k_params, k_x = jax.random.split(key)
    params = init_params(k_params, n_observations, n_actions)
    prep = prepare_params(params)            # one-time weight prep (hoisted)
    x = jax.random.normal(k_x, (batch, n_observations), jnp.float32)

    actor_out, critic_out = actor_critic_forward(x, prep)
    jax.block_until_ready((actor_out, critic_out))

    # Reference with matching bf16-input / f32-accumulate matmuls.
    w1, b1, w2, b2, wa, ba, wc, bc = params
    bf = jnp.bfloat16

    def mm(a, w):
        return jnp.dot(a.astype(bf), w.astype(bf), preferred_element_type=jnp.float32)

    h1 = jnp.maximum(mm(x, w1) + b1, 0.0)
    h2 = jnp.maximum(mm(h1, w2) + b2, 0.0)
    ref_actor = jax.nn.softmax(mm(h2, wa) + ba, axis=-1)
    ref_critic = mm(h2, wc) + bc

    assert actor_out.shape == (batch, n_actions)
    assert critic_out.shape == (batch, 1)
    assert jnp.allclose(actor_out, ref_actor, atol=2e-3, rtol=2e-3)
    assert jnp.allclose(critic_out, ref_critic, atol=2e-3, rtol=2e-3)
    assert jnp.allclose(jnp.sum(actor_out, axis=-1), 1.0, atol=2e-3)

    print("KERNEL_OK")
</pallas_src>

<mosaic_0001>
module attributes {stable_mosaic.version = 11 : i64} {
  func.func @actor_critic_kernel(%arg0: i32, %arg1: memref<8x128xf32, #tpu.memory_space<vmem>>, %arg2: memref<128x8xbf16, #tpu.memory_space<vmem>>, %arg3: memref<128x1xf32, #tpu.memory_space<vmem>>, %arg4: memref<128x128xbf16, #tpu.memory_space<vmem>>, %arg5: memref<128x1xf32, #tpu.memory_space<vmem>>, %arg6: memref<8x128xbf16, #tpu.memory_space<vmem>>, %arg7: memref<8x1xf32, #tpu.memory_space<vmem>>, %arg8: memref<8x128xf32, #tpu.memory_space<vmem>>) attributes {dimension_semantics = [#tpu.dimension_semantics<parallel>], iteration_bounds = array<i64: 1>, scalar_prefetch = 0 : i64, scratch_operands = 0 : i64, tpu.core_type = #tpu.core_type<tc>, window_params = [{transform_indices = @transform_0, window_bounds = array<i64: 8, 128>}, {pipeline_mode = #tpu.pipeline_mode<synchronous>, transform_indices = @transform_1, window_bounds = array<i64: 128, 8>}, {pipeline_mode = #tpu.pipeline_mode<synchronous>, transform_indices = @transform_2, window_bounds = array<i64: 128, 1>}, {pipeline_mode = #tpu.pipeline_mode<synchronous>, transform_indices = @transform_3, window_bounds = array<i64: 128, 128>}, {pipeline_mode = #tpu.pipeline_mode<synchronous>, transform_indices = @transform_4, window_bounds = array<i64: 128, 1>}, {pipeline_mode = #tpu.pipeline_mode<synchronous>, transform_indices = @transform_5, window_bounds = array<i64: 8, 128>}, {pipeline_mode = #tpu.pipeline_mode<synchronous>, transform_indices = @transform_6, window_bounds = array<i64: 8, 1>}, {transform_indices = @transform_7, window_bounds = array<i64: 8, 128>}]} {
    %c0 = arith.constant 0 : index
    %c0_0 = arith.constant 0 : index
    %0 = vector.load %arg1[%c0, %c0_0] : memref<8x128xf32, #tpu.memory_space<vmem>>, vector<8x128xf32>
    %1 = arith.truncf %0 : vector<8x128xf32> to vector<8x128xbf16>
    %c0_1 = arith.constant 0 : index
    %c0_2 = arith.constant 0 : index
    %2 = vector.load %arg2[%c0_1, %c0_2] : memref<128x8xbf16, #tpu.memory_space<vmem>>, vector<128x8xbf16>
    %cst = arith.constant dense<0.000000e+00> : vector<128x128xf32>
    %3 = tpu.matmul %2, %1, %cst {dimension_numbers = #tpu.dot_dimension_numbers<[1], [0], [0], [1], [0, 0, 1, 1], [], []>} : vector<128x8xbf16>, vector<8x128xbf16>, vector<128x128xf32> -> vector<128x128xf32>
    %c0_3 = arith.constant 0 : index
    %c0_4 = arith.constant 0 : index
    %4 = vector.load %arg3[%c0_3, %c0_4] : memref<128x1xf32, #tpu.memory_space<vmem>>, vector<128x1xf32>
    %5 = vector.broadcast %4 : vector<128x1xf32> to vector<128x128xf32>
    %6 = arith.addf %3, %5 : vector<128x128xf32>
    %cst_5 = arith.constant 0.000000e+00 : f32
    %7 = vector.broadcast %cst_5 : f32 to vector<128x128xf32>
    %8 = arith.maximumf %6, %7 : vector<128x128xf32>
    %c0_6 = arith.constant 0 : index
    %c0_7 = arith.constant 0 : index
    %9 = vector.load %arg4[%c0_6, %c0_7] : memref<128x128xbf16, #tpu.memory_space<vmem>>, vector<128x128xbf16>
    %10 = arith.truncf %8 : vector<128x128xf32> to vector<128x128xbf16>
    %cst_8 = arith.constant dense<0.000000e+00> : vector<128x128xf32>
    %11 = tpu.matmul %9, %10, %cst_8 {dimension_numbers = #tpu.dot_dimension_numbers<[1], [0], [0], [1], [0, 0, 1, 1], [], []>} : vector<128x128xbf16>, vector<128x128xbf16>, vector<128x128xf32> -> vector<128x128xf32>
    %c0_9 = arith.constant 0 : index
    %c0_10 = arith.constant 0 : index
    %12 = vector.load %arg5[%c0_9, %c0_10] : memref<128x1xf32, #tpu.memory_space<vmem>>, vector<128x1xf32>
    %13 = vector.broadcast %12 : vector<128x1xf32> to vector<128x128xf32>
    %14 = arith.addf %11, %13 : vector<128x128xf32>
    %cst_11 = arith.constant 0.000000e+00 : f32
    %15 = vector.broadcast %cst_11 : f32 to vector<128x128xf32>
    %16 = arith.maximumf %14, %15 : vector<128x128xf32>
    %c0_12 = arith.constant 0 : index
    %c0_13 = arith.constant 0 : index
    %17 = vector.load %arg6[%c0_12, %c0_13] : memref<8x128xbf16, #tpu.memory_space<vmem>>, vector<8x128xbf16>
    %18 = arith.truncf %16 : vector<128x128xf32> to vector<128x128xbf16>
    %cst_14 = arith.constant dense<0.000000e+00> : vector<8x128xf32>
    %19 = tpu.matmul %17, %18, %cst_14 {dimension_numbers = #tpu.dot_dimension_numbers<[1], [0], [0], [1], [0, 0, 1, 1], [], []>} : vector<8x128xbf16>, vector<128x128xbf16>, vector<8x128xf32> -> vector<8x128xf32>
    %c0_15 = arith.constant 0 : index
    %c0_16 = arith.constant 0 : index
    %20 = vector.load %arg7[%c0_15, %c0_16] : memref<8x1xf32, #tpu.memory_space<vmem>>, vector<8x1xf32>
    %21 = vector.broadcast %20 : vector<8x1xf32> to vector<8x128xf32>
    %22 = arith.addf %19, %21 : vector<8x128xf32>
    %c0_17 = arith.constant 0 : index
    %c0_18 = arith.constant 0 : index
    %23 = vector.load %arg8[%c0_17, %c0_18] : memref<8x128xf32, #tpu.memory_space<vmem>>, vector<8x128xf32>
    tpu.vector_store %arg8[%c0_17, %c0_18], %22 {strides = array<i32>} : memref<8x128xf32, #tpu.memory_space<vmem>>, vector<8x128xf32>,
    return
  }
  func.func @transform_0(%arg0: i32) -> (i32, i32) {
    %c0_i32 = arith.constant 0 : i32
    %c0_i32_0 = arith.constant 0 : i32
    return %c0_i32, %arg0 : i32, i32
  }
  func.func @transform_1(%arg0: i32) -> (i32, i32) {
    %c0_i32 = arith.constant 0 : i32
    %c0_i32_0 = arith.constant 0 : i32
    %c0_i32_1 = arith.constant 0 : i32
    return %c0_i32, %c0_i32_0 : i32, i32
  }
  func.func @transform_2(%arg0: i32) -> (i32, i32) {
    %c0_i32 = arith.constant 0 : i32
    %c0_i32_0 = arith.constant 0 : i32
    %c0_i32_1 = arith.constant 0 : i32
    return %c0_i32, %c0_i32_0 : i32, i32
  }
  func.func @transform_3(%arg0: i32) -> (i32, i32) {
    %c0_i32 = arith.constant 0 : i32
    %c0_i32_0 = arith.constant 0 : i32
    %c0_i32_1 = arith.constant 0 : i32
    return %c0_i32, %c0_i32_0 : i32, i32
  }
  func.func @transform_4(%arg0: i32) -> (i32, i32) {
    %c0_i32 = arith.constant 0 : i32
    %c0_i32_0 = arith.constant 0 : i32
    %c0_i32_1 = arith.constant 0 : i32
    return %c0_i32, %c0_i32_0 : i32, i32
  }
  func.func @transform_5(%arg0: i32) -> (i32, i32) {
    %c0_i32 = arith.constant 0 : i32
    %c0_i32_0 = arith.constant 0 : i32
    %c0_i32_1 = arith.constant 0 : i32
    return %c0_i32, %c0_i32_0 : i32, i32
  }
  func.func @transform_6(%arg0: i32) -> (i32, i32) {
    %c0_i32 = arith.constant 0 : i32
    %c0_i32_0 = arith.constant 0 : i32
    %c0_i32_1 = arith.constant 0 : i32
    return %c0_i32, %c0_i32_0 : i32, i32
  }
  func.func @transform_7(%arg0: i32) -> (i32, i32) {
    %c0_i32 = arith.constant 0 : i32
    %c0_i32_0 = arith.constant 0 : i32
    return %c0_i32, %arg0 : i32, i32
  }
}

</mosaic_0001>

<llo_original>
// kernel: tpu_custom_call.1
$region0: #{tpu_custom_call.1}
  #allocation0 [shape = 'u32[]', space=smem, size = 0x4, offset = 0x4, fixed_abs, tag = 'smem constant byte address 0x4 - core index']
  #allocation1 [shape = 'u32[72,128]{1,0:T(1,128)}', space=vmem, size = 0x9000, scoped, tag = 'internal scratch']
  %s0 = inlined_call_operand.vmem [shape: f32[8,128], index: 0, kind: input, shape index: {}]
  %s1 = inlined_call_operand.vmem [shape: bf16[128,8], index: 1, kind: input, shape index: {}]
  %s2 = inlined_call_operand.vmem [shape: f32[128,1], index: 2, kind: input, shape index: {}]
  %s3 = inlined_call_operand.vmem [shape: bf16[128,128], index: 3, kind: input, shape index: {}]
  %s4 = inlined_call_operand.vmem [shape: f32[128,1], index: 4, kind: input, shape index: {}]
  %s5 = inlined_call_operand.vmem [shape: bf16[8,128], index: 5, kind: input, shape index: {}]
  %s6 = inlined_call_operand.vmem [shape: f32[8,1], index: 6, kind: input, shape index: {}]
  %s7 = inlined_call_operand.hbm [shape: f32[8,128], index: 7, kind: output, shape index: {}]
  %s8 = sld [smem:[#allocation0]]
  $region38: #{tpu_custom_call.1} parent=0
    _
  %s10 = ssub.s32 1, %s8
  %s11 = scalar_select 0, %s10, %s8
  $region1: #{tpu_custom_call.1} parent=0
    #allocation2 [shape = 'u8[4096]{0}', space=vmem, size = 0x1000, scoped, tag = 'output window, operand 0, single buffered']
    #allocation3 [shape = 's32[1]{0}', space=sflag, size = 0x4, scoped, tag = 'scoped memory for tpu_custom_call.1']
    %12 = vsyncpa [#allocation3], 0
    // Predicated region
    $region2: #{tpu_custom_call.1} parent=1 // pred_check
      _
    $region3: #{tpu_custom_call.1} parent=1 // pred_check_branch
      %14 = sbr.rel (0) target = $region5
    $region4: #{tpu_custom_call.1} parent=1 // pred_region
      _
    $region5: #{tpu_custom_call.1} parent=1 // pred_fallthru
      _
    // Predicated region
    $region6: #{tpu_custom_call.1} parent=1 // pred_check
      _
    $region7: #{tpu_custom_call.1} parent=1 // pred_check_branch
      %16 = sbr.rel (0) target = $region9
    $region8: #{tpu_custom_call.1} parent=1 // pred_region
      _
    $region9: #{tpu_custom_call.1} parent=1 // pred_fallthru
      _
    // Predicated region
    $region10: #{tpu_custom_call.1} parent=1 // pred_check
      _
    $region11: #{tpu_custom_call.1} parent=1 // pred_check_branch
      %18 = sbr.rel (0) target = $region13
    $region12: #{tpu_custom_call.1} parent=1 // pred_region
      _
    $region13: #{tpu_custom_call.1} parent=1 // pred_fallthru
      _
    // Predicated region
    $region14: #{tpu_custom_call.1} parent=1 // pred_check
      _
    $region15: #{tpu_custom_call.1} parent=1 // pred_check_branch
      %20 = sbr.rel (0) target = $region17
    $region16: #{tpu_custom_call.1} parent=1 // pred_region
      _
    $region17: #{tpu_custom_call.1} parent=1 // pred_fallthru
      _
    // Predicated region
    $region18: #{tpu_custom_call.1} parent=1 // pred_check
      _
    $region19: #{tpu_custom_call.1} parent=1 // pred_check_branch
      %22 = sbr.rel (0) target = $region21
    $region20: #{tpu_custom_call.1} parent=1 // pred_region
      _
    $region21: #{tpu_custom_call.1} parent=1 // pred_fallthru
      _
    // Predicated region
    $region22: #{tpu_custom_call.1} parent=1 // pred_check
      _
    $region23: #{tpu_custom_call.1} parent=1 // pred_check_branch
      %24 = sbr.rel (0) target = $region25
    $region24: #{tpu_custom_call.1} parent=1 // pred_region
      _
    $region25: #{tpu_custom_call.1} parent=1 // pred_fallthru
      _
    // Predicated region
    $region26: #{tpu_custom_call.1} parent=1 // pred_check
      _
    $region27: #{tpu_custom_call.1} parent=1 // pred_check_branch
      %26 = sbr.rel (0) target = $region29
    $region28: #{tpu_custom_call.1} parent=1 // pred_region
      _
    $region29: #{tpu_custom_call.1} parent=1 // pred_fallthru
      _
    %v28 = vld [vmem:[%s0] sm:$0xff]
    %v29 = vpack.c.bf16 %v28, %v28
    %v30 = vld [vmem:[%s1] sm:$0xf]
    %v31 = vld [vmem:[%s1 + $0x4] sm:$0xf]
    %v32 = vld [vmem:[%s1 + $0x8] sm:$0xf]
    %v33 = vld [vmem:[%s1 + $0xc] sm:$0xf]
    %v34 = vld [vmem:[%s1 + $0x10] sm:$0xf]
    %v35 = vld [vmem:[%s1 + $0x14] sm:$0xf]
    %v36 = vld [vmem:[%s1 + $0x18] sm:$0xf]
    %v37 = vld [vmem:[%s1 + $0x1c] sm:$0xf]
    %v38 = vld [vmem:[%s1 + $0x20] sm:$0xf]
    %v39 = vld [vmem:[%s1 + $0x24] sm:$0xf]
    %v40 = vld [vmem:[%s1 + $0x28] sm:$0xf]
    %v41 = vld [vmem:[%s1 + $0x2c] sm:$0xf]
    %v42 = vld [vmem:[%s1 + $0x30] sm:$0xf]
    %v43 = vld [vmem:[%s1 + $0x34] sm:$0xf]
    %v44 = vld [vmem:[%s1 + $0x38] sm:$0xf]
    %v45 = vld [vmem:[%s1 + $0x3c] sm:$0xf]
    %v46 = vld [vmem:[%s2] sm:$0xff]
    %v47 = vld [vmem:[%s2 + $0x8] sm:$0xff]
    %v48 = vld [vmem:[%s2 + $0x10] sm:$0xff]
    %v49 = vld [vmem:[%s2 + $0x18] sm:$0xff]
    %v50 = vld [vmem:[%s2 + $0x20] sm:$0xff]
    %v51 = vld [vmem:[%s2 + $0x28] sm:$0xff]
    %v52 = vld [vmem:[%s2 + $0x30] sm:$0xff]
    %v53 = vld [vmem:[%s2 + $0x38] sm:$0xff]
    %v54 = vld [vmem:[%s2 + $0x40] sm:$0xff]
    %v55 = vld [vmem:[%s2 + $0x48] sm:$0xff]
    %v56 = vld [vmem:[%s2 + $0x50] sm:$0xff]
    %v57 = vld [vmem:[%s2 + $0x58] sm:$0xff]
    %v58 = vld [vmem:[%s2 + $0x60] sm:$0xff]
    %v59 = vld [vmem:[%s2 + $0x68] sm:$0xff]
    %v60 = vld [vmem:[%s2 + $0x70] sm:$0xff]
    %v61 = vld [vmem:[%s2 + $0x78] sm:$0xff]
    %63 = vset.pattern.permute.xlu0 0
    %64 = vperm.xlu0 %63, %v46
    %v65 = vpop.permute.xlu0 %64
    %68 = vset.pattern.permute.xlu0 0
    %69 = vperm.xlu0 %68, %v47
    %v70 = vpop.permute.xlu0 %69
    %73 = vset.pattern.permute.xlu0 0
    %74 = vperm.xlu0 %73, %v48
    %v75 = vpop.permute.xlu0 %74
    %78 = vset.pattern.permute.xlu0 0
    %79 = vperm.xlu0 %78, %v49
    %v80 = vpop.permute.xlu0 %79
    %83 = vset.pattern.permute.xlu0 0
    %84 = vperm.xlu0 %83, %v50
    %v85 = vpop.permute.xlu0 %84
    %88 = vset.pattern.permute.xlu0 0
    %89 = vperm.xlu0 %88, %v51
    %v90 = vpop.permute.xlu0 %89
    %93 = vset.pattern.permute.xlu0 0
    %94 = vperm.xlu0 %93, %v52
    %v95 = vpop.permute.xlu0 %94
    %98 = vset.pattern.permute.xlu0 0
    %99 = vperm.xlu0 %98, %v53
    %v100 = vpop.permute.xlu0 %99
    %103 = vset.pattern.permute.xlu0 0
    %104 = vperm.xlu0 %103, %v54
    %v105 = vpop.permute.xlu0 %104
    %108 = vset.pattern.permute.xlu0 0
    %109 = vperm.xlu0 %108, %v55
    %v110 = vpop.permute.xlu0 %109
    %113 = vset.pattern.permute.xlu0 0
    %114 = vperm.xlu0 %113, %v56
    %v115 = vpop.permute.xlu0 %114
    %118 = vset.pattern.permute.xlu0 0
    %119 = vperm.xlu0 %118, %v57
    %v120 = vpop.permute.xlu0 %119
    %123 = vset.pattern.permute.xlu0 0
    %124 = vperm.xlu0 %123, %v58
    %v125 = vpop.permute.xlu0 %124
    %128 = vset.pattern.permute.xlu0 0
    %129 = vperm.xlu0 %128, %v59
    %v130 = vpop.permute.xlu0 %129
    %133 = vset.pattern.permute.xlu0 0
    %134 = vperm.xlu0 %133, %v60
    %v135 = vpop.permute.xlu0 %134
    %138 = vset.pattern.permute.xlu0 0
    %139 = vperm.xlu0 %138, %v61
    %v140 = vpop.permute.xlu0 %139
    %v158 = vunpack.c.l.b16 %v30
    %v159 = vunpack.c.l.b16 %v31
    %v160 = vunpack.c.l.b16 %v32
    %v161 = vunpack.c.l.b16 %v33
    %v162 = vunpack.c.l.b16 %v34
    %v163 = vunpack.c.l.b16 %v35
    %v164 = vunpack.c.l.b16 %v36
    %v165 = vunpack.c.l.b16 %v37
    %v166 = vunpack.c.l.b16 %v38
    %v167 = vunpack.c.l.b16 %v39
    %v168 = vunpack.c.l.b16 %v40
    %v169 = vunpack.c.l.b16 %v41
    %v170 = vunpack.c.l.b16 %v42
    %v171 = vunpack.c.l.b16 %v43
    %v172 = vunpack.c.l.b16 %v44
    %v173 = vunpack.c.l.b16 %v45
    %v174 = vpack.c.b16 %v159, %v158
    %v175 = vpack.c.b16 %v161, %v160
    %v176 = vpack.c.b16 %v163, %v162
    %v177 = vpack.c.b16 %v165, %v164
    %v178 = vpack.c.b16 %v167, %v166
    %v179 = vpack.c.b16 %v169, %v168
    %v180 = vpack.c.b16 %v171, %v170
    %v181 = vpack.c.b16 %v173, %v172
    %vm182 = vcmask 64512
    %v184 = vsel %vm182, %v174, 0
    %v187 = vsel %vm182, %v175, 0
    %v190 = vsel %vm182, %v176, 0
    %v193 = vsel %vm182, %v177, 0
    %v196 = vsel %vm182, %v178, 0
    %v199 = vsel %vm182, %v179, 0
    %v202 = vsel %vm182, %v180, 0
    %v205 = vsel %vm182, %v181, 0
    %vm207 = vcmask 1043456
    %v209 = vsel %vm207, %v29, 0
    %211 = vmatpush.bf16.msra.mxu0 0
    %212 = vmatpush.bf16.msra.mxu0 0
    %213 = vmatpush.bf16.msra.mxu0 0
    %214 = vmatpush.bf16.msra.mxu0 0
    %215 = vmatpush.bf16.msra.mxu0 0
    %216 = vmatpush.bf16.msra.mxu0 0
    %217 = vmatpush.bf16.msra.mxu0 0
    %218 = vmatpush.bf16.msra.mxu0 %v209
    %219 = vmatmul.bf16.gmra.mxu0 %v184
    %v220 = vpop.f32.mrf.mxu0
    %v221 = vadd.f32 %v65, %v220
    %v222 = vpop.f32.mrf.mxu0
    %v223 = vadd.f32 %v70, %v222
    %224 = vmatmul.bf16.gmra.mxu0 %v187
    %v225 = vpop.f32.mrf.mxu0
    %v226 = vadd.f32 %v75, %v225
    %v227 = vpop.f32.mrf.mxu0
    %v228 = vadd.f32 %v80, %v227
    %229 = vmatmul.bf16.gmra.mxu0 %v190
    %v230 = vpop.f32.mrf.mxu0
    %v231 = vadd.f32 %v85, %v230
    %v232 = vpop.f32.mrf.mxu0
    %v233 = vadd.f32 %v90, %v232
    %234 = vmatmul.bf16.gmra.mxu0 %v193
    %v235 = vpop.f32.mrf.mxu0
    %v236 = vadd.f32 %v95, %v235
    %v237 = vpop.f32.mrf.mxu0
    %v238 = vadd.f32 %v100, %v237
    %239 = vmatmul.bf16.gmra.mxu0 %v196
    %v240 = vpop.f32.mrf.mxu0
    %v241 = vadd.f32 %v105, %v240
    %v242 = vpop.f32.mrf.mxu0
    %v243 = vadd.f32 %v110, %v242
    %244 = vmatmul.bf16.gmra.mxu0 %v199
    %v245 = vpop.f32.mrf.mxu0
    %v246 = vadd.f32 %v115, %v245
    %v247 = vpop.f32.mrf.mxu0
    %v248 = vadd.f32 %v120, %v247
    %249 = vmatmul.bf16.gmra.mxu0 %v202
    %v250 = vpop.f32.mrf.mxu0
    %v251 = vadd.f32 %v125, %v250
    %v252 = vpop.f32.mrf.mxu0
    %v253 = vadd.f32 %v130, %v252
    %254 = vmatmul.bf16.gmra.mxu0 %v205
    %v255 = vpop.f32.mrf.mxu0
    %v256 = vadd.f32 %v135, %v255
    %v257 = vpop.f32.mrf.mxu0
    %v258 = vadd.f32 %v140, %v257
    %259 = vdwg.mxu0
    %v260 = vmax.f32 %v221, 0.0
    %v261 = vmax.f32 %v223, 0.0
    %v262 = vmax.f32 %v226, 0.0
    %v263 = vmax.f32 %v228, 0.0
    %v264 = vmax.f32 %v231, 0.0
    %v265 = vmax.f32 %v233, 0.0
    %v266 = vmax.f32 %v236, 0.0
    %v267 = vmax.f32 %v238, 0.0
    %v268 = vmax.f32 %v241, 0.0
    %v269 = vmax.f32 %v243, 0.0
    %v270 = vmax.f32 %v246, 0.0
    %v271 = vmax.f32 %v248, 0.0
    %v272 = vmax.f32 %v251, 0.0
    %v273 = vmax.f32 %v253, 0.0
    %v274 = vmax.f32 %v256, 0.0
    %v275 = vmax.f32 %v258, 0.0
    %v276 = vld [vmem:[%s3] sm:$0xf]
    %v277 = vld [vmem:[%s3 + $0x4] sm:$0xf]
    %v278 = vld [vmem:[%s3 + $0x8] sm:$0xf]
    %v279 = vld [vmem:[%s3 + $0xc] sm:$0xf]
    %v280 = vld [vmem:[%s3 + $0x10] sm:$0xf]
    %v281 = vld [vmem:[%s3 + $0x14] sm:$0xf]
    %v282 = vld [vmem:[%s3 + $0x18] sm:$0xf]
    %v283 = vld [vmem:[%s3 + $0x1c] sm:$0xf]
    %v284 = vld [vmem:[%s3 + $0x20] sm:$0xf]
    %v285 = vld [vmem:[%s3 + $0x24] sm:$0xf]
    %v286 = vld [vmem:[%s3 + $0x28] sm:$0xf]
    %v287 = vld [vmem:[%s3 + $0x2c] sm:$0xf]
    %v288 = vld [vmem:[%s3 + $0x30] sm:$0xf]
    %v289 = vld [vmem:[%s3 + $0x34] sm:$0xf]
    %v290 = vld [vmem:[%s3 + $0x38] sm:$0xf]
    %v291 = vld [vmem:[%s3 + $0x3c] sm:$0xf]
    %v292 = vpack.c.bf16 %v261, %v260
    %v293 = vpack.c.bf16 %v263, %v262
    %v294 = vpack.c.bf16 %v265, %v264
    %v295 = vpack.c.bf16 %v267, %v266
    %v296 = vpack.c.bf16 %v269, %v268
    %v297 = vpack.c.bf16 %v271, %v270
    %v298 = vpack.c.bf16 %v273, %v272
    %v299 = vpack.c.bf16 %v275, %v274
    %v300 = vld [vmem:[%s4] sm:$0xff]
    %v301 = vld [vmem:[%s4 + $0x8] sm:$0xff]
    %v302 = vld [vmem:[%s4 + $0x10] sm:$0xff]
    %v303 = vld [vmem:[%s4 + $0x18] sm:$0xff]
    %v304 = vld [vmem:[%s4 + $0x20] sm:$0xff]
    %v305 = vld [vmem:[%s4 + $0x28] sm:$0xff]
    %v306 = vld [vmem:[%s4 + $0x30] sm:$0xff]
    %v307 = vld [vmem:[%s4 + $0x38] sm:$0xff]
    %v308 = vld [vmem:[%s4 + $0x40] sm:$0xff]
    %v309 = vld [vmem:[%s4 + $0x48] sm:$0xff]
    %v310 = vld [vmem:[%s4 + $0x50] sm:$0xff]
    %v311 = vld [vmem:[%s4 + $0x58] sm:$0xff]
    %v312 = vld [vmem:[%s4 + $0x60] sm:$0xff]
    %v313 = vld [vmem:[%s4 + $0x68] sm:$0xff]
    %v314 = vld [vmem:[%s4 + $0x70] sm:$0xff]
    %v315 = vld [vmem:[%s4 + $0x78] sm:$0xff]
    %317 = vset.pattern.permute.xlu0 0
    %318 = vperm.xlu0 %317, %v300
    %v319 = vpop.permute.xlu0 %318
    %322 = vset.pattern.permute.xlu0 0
    %323 = vperm.xlu0 %322, %v301
    %v324 = vpop.permute.xlu0 %323
    %327 = vset.pattern.permute.xlu0 0
    %328 = vperm.xlu0 %327, %v302
    %v329 = vpop.permute.xlu0 %328
    %332 = vset.pattern.permute.xlu0 0
    %333 = vperm.xlu0 %332, %v303
    %v334 = vpop.permute.xlu0 %333
    %337 = vset.pattern.permute.xlu0 0
    %338 = vperm.xlu0 %337, %v304
    %v339 = vpop.permute.xlu0 %338
    %342 = vset.pattern.permute.xlu0 0
    %343 = vperm.xlu0 %342, %v305
    %v344 = vpop.permute.xlu0 %343
    %347 = vset.pattern.permute.xlu0 0
    %348 = vperm.xlu0 %347, %v306
    %v349 = vpop.permute.xlu0 %348
    %352 = vset.pattern.permute.xlu0 0
    %353 = vperm.xlu0 %352, %v307
    %v354 = vpop.permute.xlu0 %353
    %357 = vset.pattern.permute.xlu0 0
    %358 = vperm.xlu0 %357, %v308
    %v359 = vpop.permute.xlu0 %358
    %362 = vset.pattern.permute.xlu0 0
    %363 = vperm.xlu0 %362, %v309
    %v364 = vpop.permute.xlu0 %363
    %367 = vset.pattern.permute.xlu0 0
    %368 = vperm.xlu0 %367, %v310
    %v369 = vpop.permute.xlu0 %368
    %372 = vset.pattern.permute.xlu0 0
    %373 = vperm.xlu0 %372, %v311
    %v374 = vpop.permute.xlu0 %373
    %377 = vset.pattern.permute.xlu0 0
    %378 = vperm.xlu0 %377, %v312
    %v379 = vpop.permute.xlu0 %378
    %382 = vset.pattern.permute.xlu0 0
    %383 = vperm.xlu0 %382, %v313
    %v384 = vpop.permute.xlu0 %383
    %387 = vset.pattern.permute.xlu0 0
    %388 = vperm.xlu0 %387, %v314
    %v389 = vpop.permute.xlu0 %388
    %392 = vset.pattern.permute.xlu0 0
    %393 = vperm.xlu0 %392, %v315
    %v394 = vpop.permute.xlu0 %393
    %v412 = vunpack.c.l.b16 %v276
    %v413 = vunpack.c.l.b16 %v277
    %v414 = vunpack.c.l.b16 %v278
    %v415 = vunpack.c.l.b16 %v279
    %v416 = vunpack.c.l.b16 %v280
    %v417 = vunpack.c.l.b16 %v281
    %v418 = vunpack.c.l.b16 %v282
    %v419 = vunpack.c.l.b16 %v283
    %v420 = vunpack.c.l.b16 %v284
    %v421 = vunpack.c.l.b16 %v285
    %v422 = vunpack.c.l.b16 %v286
    %v423 = vunpack.c.l.b16 %v287
    %v424 = vunpack.c.l.b16 %v288
    %v425 = vunpack.c.l.b16 %v289
    %v426 = vunpack.c.l.b16 %v290
    %v427 = vunpack.c.l.b16 %v291
    %v428 = vpack.c.b16 %v413, %v412
    %v429 = vpack.c.b16 %v415, %v414
    %v430 = vpack.c.b16 %v417, %v416
    %v431 = vpack.c.b16 %v419, %v418
    %v432 = vpack.c.b16 %v421, %v420
    %v433 = vpack.c.b16 %v423, %v422
    %v434 = vpack.c.b16 %v425, %v424
    %v435 = vpack.c.b16 %v427, %v426
    %444 = vmatpush.bf16.msra.mxu0 %v299
    %445 = vmatpush.bf16.msra.mxu0 %v298
    %446 = vmatpush.bf16.msra.mxu0 %v297
    %447 = vmatpush.bf16.msra.mxu0 %v296
    %448 = vmatpush.bf16.msra.mxu0 %v295
    %449 = vmatpush.bf16.msra.mxu0 %v294
    %450 = vmatpush.bf16.msra.mxu0 %v293
    %451 = vmatpush.bf16.msra.mxu0 %v292
    %452 = vmatmul.bf16.gmra.mxu0 %v428
    %v453 = vpop.f32.mrf.mxu0
    %v454 = vadd.f32 %v319, %v453
    %v455 = vpop.f32.mrf.mxu0
    %v456 = vadd.f32 %v324, %v455
    %457 = vmatmul.bf16.gmra.mxu0 %v429
    %v458 = vpop.f32.mrf.mxu0
    %v459 = vadd.f32 %v329, %v458
    %v460 = vpop.f32.mrf.mxu0
    %v461 = vadd.f32 %v334, %v460
    %462 = vmatmul.bf16.gmra.mxu0 %v430
    %v463 = vpop.f32.mrf.mxu0
    %v464 = vadd.f32 %v339, %v463
    %v465 = vpop.f32.mrf.mxu0
    %v466 = vadd.f32 %v344, %v465
    %467 = vmatmul.bf16.gmra.mxu0 %v431
    %v468 = vpop.f32.mrf.mxu0
    %v469 = vadd.f32 %v349, %v468
    %v470 = vpop.f32.mrf.mxu0
    %v471 = vadd.f32 %v354, %v470
    %472 = vmatmul.bf16.gmra.mxu0 %v432
    %v473 = vpop.f32.mrf.mxu0
    %v474 = vadd.f32 %v359, %v473
    %v475 = vpop.f32.mrf.mxu0
    %v476 = vadd.f32 %v364, %v475
    %477 = vmatmul.bf16.gmra.mxu0 %v433
    %v478 = vpop.f32.mrf.mxu0
    %v479 = vadd.f32 %v369, %v478
    %v480 = vpop.f32.mrf.mxu0
    %v481 = vadd.f32 %v374, %v480
    %482 = vmatmul.bf16.gmra.mxu0 %v434
    %v483 = vpop.f32.mrf.mxu0
    %v484 = vadd.f32 %v379, %v483
    %v485 = vpop.f32.mrf.mxu0
    %v486 = vadd.f32 %v384, %v485
    %487 = vmatmul.bf16.gmra.mxu0 %v435
    %v488 = vpop.f32.mrf.mxu0
    %v489 = vadd.f32 %v389, %v488
    %v490 = vpop.f32.mrf.mxu0
    %v491 = vadd.f32 %v394, %v490
    %492 = vdwg.mxu0
    %v493 = vmax.f32 %v454, 0.0
    %v494 = vmax.f32 %v456, 0.0
    %v495 = vmax.f32 %v459, 0.0
    %v496 = vmax.f32 %v461, 0.0
    %v497 = vmax.f32 %v464, 0.0
    %v498 = vmax.f32 %v466, 0.0
    %v499 = vmax.f32 %v469, 0.0
    %v500 = vmax.f32 %v471, 0.0
    %v501 = vmax.f32 %v474, 0.0
    %v502 = vmax.f32 %v476, 0.0
    %v503 = vmax.f32 %v479, 0.0
    %v504 = vmax.f32 %v481, 0.0
    %v505 = vmax.f32 %v484, 0.0
    %v506 = vmax.f32 %v486, 0.0
    %v507 = vmax.f32 %v489, 0.0
    %v508 = vmax.f32 %v491, 0.0
    %v509 = vld [vmem:[%s5] sm:$0xf]
    %v510 = vpack.c.bf16 %v494, %v493
    %v511 = vpack.c.bf16 %v496, %v495
    %v512 = vpack.c.bf16 %v498, %v497
    %v513 = vpack.c.bf16 %v500, %v499
    %v514 = vpack.c.bf16 %v502, %v501
    %v515 = vpack.c.bf16 %v504, %v503
    %v516 = vpack.c.bf16 %v506, %v505
    %v517 = vpack.c.bf16 %v508, %v507
    %v518 = vld [vmem:[%s6] sm:$0xff]
    %520 = vset.pattern.permute.xlu0 0
    %521 = vperm.xlu0 %520, %v518
    %v522 = vpop.permute.xlu0 %521
    %524 = vmatpush.bf16.msra.mxu0 %v517
    %525 = vmatpush.bf16.msra.mxu0 %v516
    %526 = vmatpush.bf16.msra.mxu0 %v515
    %527 = vmatpush.bf16.msra.mxu0 %v514
    %528 = vmatpush.bf16.msra.mxu0 %v513
    %529 = vmatpush.bf16.msra.mxu0 %v512
    %530 = vmatpush.bf16.msra.mxu0 %v511
    %531 = vmatpush.bf16.msra.mxu0 %v510
    %532 = vmatmul.bf16.gmra.mxu0 %v509
    %v533 = vpop.f32.mrf.mxu0
    %v534 = vadd.f32 %v522, %v533
    %v535 = vpop.f32.mrf.mxu0
    %536 = vdwg.mxu0
    %537 = vst [vmem:[#allocation2] sm:$0xff] %v534
    // Predicated region
    $region30: #{tpu_custom_call.1} parent=1 // pred_check
      _
    $region31: #{tpu_custom_call.1} parent=1 // pred_check_branch
      %539 = sbr.rel (0) target = $region33
    $region32: #{tpu_custom_call.1} parent=1 // pred_region
      %541 = vsyncadd [#allocation3], 0
      %s543 = sshll.u32 [#allocation2], 4
      %s544 = int_to_ptr.vmem [resolvable:$true] %s543
      %s545 = sshll.u32 %s7, 4
      %s546 = int_to_ptr.hbm [resolvable:$true] %s545
      %548 = dma.vmem_to_hbm [thread:$0]  %s544, 128, %s546, [#allocation3]
    $region33: #{tpu_custom_call.1} parent=1 // pred_fallthru
      _
    // Predicated region
    $region34: #{tpu_custom_call.1} parent=1 // pred_check
      _
    $region35: #{tpu_custom_call.1} parent=1 // pred_check_branch
      %550 = sbr.rel (0) target = $region37
    $region36: #{tpu_custom_call.1} parent=1 // pred_region
      %552 = dma.done [#allocation3], 128
    $region37: #{tpu_custom_call.1} parent=1 // pred_fallthru
      _
    %553 = vsyncpa [#allocation3], 1

</llo_original>
